<compile_context>
chip_gen: v5e
topology: v5e:2x2
jax: 0.10.0
libtpu: 0.0.40
codegen_flags: <defaults>
</compile_context>

<pallas_src>
import functools

import numpy as np
import jax
import jax.numpy as jnp
from jax.experimental import pallas as pl
from jax.experimental.pallas import tpu as pltpu


def _dino_fused_kernel(t_ref, s_ref, c_ref,            # inputs
                       loss_ref, colsum_ref,           # outputs (per-row-block partials)
                       q_scr, row_acc,                  # VMEM scratch
                       *, inv_student_temp, inv_teacher_temp, inv_norm):
    """Grid = (num_row_blocks, ncrops); row blocks outer ("parallel"), crops inner.

    t_ref:      (2, rb, D)   both teacher chunks, current row block (resident across crops)
    s_ref:      (1, rb, D)   student crop v, current row block (read once per crop)
    c_ref:      (1, D)       center (resident across the whole grid)
    loss_ref:   (1, 1, 1)    per-row-block partial loss output block
    colsum_ref: (1, 1, D)    per-row-block teacher column-sum output block
    q_scr:      (3, rb, D)   cached teacher softmaxes: [q1, q0, q0+q1]
    row_acc:    (rb, 1) f32  running per-row  sum_terms(logz - q.s)
    """
    v = pl.program_id(1)
    nv = pl.num_programs(1)

    @pl.when(v == 0)
    def _per_row_block():
        t0 = t_ref[0].astype(jnp.float32)
        t1 = t_ref[1].astype(jnp.float32)
        # Partial column sum for the EMA center update (combined in the wrapper).
        colsum_ref[0] = (jnp.sum(t0, axis=0, keepdims=True) +
                         jnp.sum(t1, axis=0, keepdims=True))
        c = c_ref[...].astype(jnp.float32)

        def _softmax(t):
            x = (t - c) * inv_teacher_temp
            x = x - jnp.max(x, axis=-1, keepdims=True)
            e = jnp.exp(x)
            return e * (1.0 / jnp.sum(e, axis=-1, keepdims=True))   # exact recip

        q0 = _softmax(t0)
        q1 = _softmax(t1)
        # Effective q for student crop v is q_scr[min(v, 2)]:
        #   v == 0 -> only the iq=1 term          -> q1
        #   v == 1 -> only the iq=0 term          -> q0
        #   v >= 2 -> both terms (iq=0 and iq=1)  -> q0 + q1
        q_scr[0] = q1.astype(q_scr.dtype)
        q_scr[1] = q0.astype(q_scr.dtype)
        q_scr[2] = (q0 + q1).astype(q_scr.dtype)
        row_acc[...] = jnp.zeros_like(row_acc)

    # Student log-partition via logsumexp; cross-entropy identity (rows of q sum to 1):
    #   sum_j -q_j * (s_j - logz) = logz - sum_j q_j * s_j
    s = s_ref[0].astype(jnp.float32) * inv_student_temp
    m = jnp.max(s, axis=-1, keepdims=True)
    logz = m + jnp.log(jnp.sum(jnp.exp(s - m), axis=-1, keepdims=True))   # (rb, 1)
    q_eff = q_scr[jnp.minimum(v, 2)].astype(jnp.float32)
    qdots = jnp.sum(q_eff * s, axis=-1, keepdims=True)                    # (rb, 1)
    n_terms = jnp.where(v >= 2, 2.0, 1.0)
    row_acc[...] = row_acc[...] + n_terms * logz - qdots

    @pl.when(v == nv - 1)
    def _finalize():
        # Single cross-lane reduce + scale, once per row block.
        loss_ref[0] = jnp.sum(row_acc[...], keepdims=True) * inv_norm


def _pick_row_block(batch, max_rb=64):
    """Largest multiple of 8 that divides `batch` (<= max_rb); falls back to full."""
    for rb in range(min(max_rb, batch), 7, -8):
        if rb % 8 == 0 and batch % rb == 0:
            return rb
    return batch


def dino_loss_forward(student_output, teacher_output, center, *, ncrops,
                      student_temp, teacher_temp, center_momentum,
                      row_block=None, q_cache_dtype=jnp.float32,
                      student_buffers=None):
    total_rows_s, out_dim = student_output.shape
    assert total_rows_s % ncrops == 0 and ncrops >= 2
    batch = total_rows_s // ncrops
    assert teacher_output.shape == (2 * batch, out_dim)
    n_loss_terms = 2 * (ncrops - 1)

    rb = row_block if row_block is not None else _pick_row_block(batch)
    assert batch % rb == 0
    num_row_blocks = batch // rb

    # Crop-major views: one crop's row block is a contiguous rectangular tile.
    student_3d = student_output.reshape(ncrops, batch, out_dim)
    teacher_3d = teacher_output.reshape(2, batch, out_dim)

    kernel = functools.partial(
        _dino_fused_kernel,
        inv_student_temp=1.0 / float(student_temp),
        inv_teacher_temp=1.0 / float(teacher_temp),
        inv_norm=1.0 / (float(batch) * float(n_loss_terms)),
    )

    # Explicit VMEM budget: 2x double-buffered inputs/outputs + q cache + accumulator.
    t_isz = teacher_output.dtype.itemsize
    s_isz = student_output.dtype.itemsize
    q_isz = jnp.dtype(q_cache_dtype).itemsize
    needed = (2 * rb * out_dim * t_isz * 2            # teacher block (double-buffered)
              + rb * out_dim * s_isz * max(2, student_buffers or 2)
              + out_dim * center.dtype.itemsize * 2   # center
              + (4 + out_dim * 4) * 2                 # output blocks
              + 3 * rb * out_dim * q_isz              # cached q0/q1/q0+q1
              + rb * 4)                               # row accumulator
    vmem_limit = max(32 << 20, int(needed) + (8 << 20))

    # Optional deeper buffering on the student stream (v5e: exposed DMA).
    if student_buffers is None:
        student_spec = pl.BlockSpec((1, rb, out_dim), lambda r, v: (v, r, 0))
    else:
        student_spec = pl.BlockSpec((1, rb, out_dim), lambda r, v: (v, r, 0),
                                    pipeline_mode=pl.Buffered(student_buffers))

    loss_part, colsum_part = pl.pallas_call(
        kernel,
        out_shape=(
            jax.ShapeDtypeStruct((num_row_blocks, 1, 1), jnp.float32),        # loss partials
            jax.ShapeDtypeStruct((num_row_blocks, 1, out_dim), jnp.float32),  # col-sum partials
        ),
        grid_spec=pltpu.PrefetchScalarGridSpec(
            num_scalar_prefetch=0,
            grid=(num_row_blocks, ncrops),
            in_specs=[
                pl.BlockSpec((2, rb, out_dim), lambda r, v: (0, r, 0)),   # teacher (resident per r)
                student_spec,                                             # student crop v
                pl.BlockSpec((1, out_dim), lambda r, v: (0, 0)),          # center (resident)
            ],
            out_specs=[
                pl.BlockSpec((1, 1, 1), lambda r, v: (r, 0, 0)),
                pl.BlockSpec((1, 1, out_dim), lambda r, v: (r, 0, 0)),
            ],
            scratch_shapes=[
                pltpu.VMEM((3, rb, out_dim), q_cache_dtype),   # cached teacher softmaxes
                pltpu.VMEM((rb, 1), jnp.float32),              # per-row loss accumulator
            ],
        ),
        compiler_params=pltpu.CompilerParams(
            dimension_semantics=("parallel", "arbitrary"),
            vmem_limit_bytes=vmem_limit),
    )(teacher_3d, student_3d, center)

    # Tiny combines in the wrapper (each core wrote disjoint row-block partials).
    loss = jnp.sum(loss_part)
    batch_center = jnp.sum(colsum_part[:, 0, :], axis=0, keepdims=True) / (2.0 * batch)
    # TODO(synk): dist.all_reduce of batch_center across data-parallel workers is
    # omitted (single device / world_size == 1).
    new_center = center * center_momentum + batch_center * (1.0 - center_momentum)
    return loss, new_center


def _reference_loss(student_output, teacher_output, center, ncrops,
                    student_temp, teacher_temp):
    s = student_output / student_temp
    s_chunks = jnp.split(s, ncrops, axis=0)
    q = jax.nn.softmax((teacher_output - center) / teacher_temp, axis=-1)
    q_chunks = jnp.split(q, 2, axis=0)
    total = 0.0
    n = 0
    for iq, qc in enumerate(q_chunks):
        for v in range(ncrops):
            if v == iq:
                continue
            loss = jnp.sum(-qc * jax.nn.log_softmax(s_chunks[v], axis=-1), axis=-1)
            total = total + loss.mean()
            n += 1
    return total / n


if __name__ == "__main__":
    # Small, (8,128)-friendly shapes consistent with DINOLoss.
    out_dim = 256
    ncrops = 4
    batch = 16
    warmup_teacher_temp = 0.04
    teacher_temp = 0.07
    warmup_teacher_temp_epochs = 5
    nepochs = 10
    student_temp = 0.1
    center_momentum = 0.9
    epoch = 2

    # Teacher temperature schedule (host-side glue, matches the module's __init__).
    teacher_temp_schedule = np.concatenate((
        np.linspace(warmup_teacher_temp, teacher_temp, warmup_teacher_temp_epochs),
        np.ones(nepochs - warmup_teacher_temp_epochs) * teacher_temp,
    ))
    t_temp = float(teacher_temp_schedule[epoch])

    key = jax.random.PRNGKey(0)
    k1, k2 = jax.random.split(key)
    student_output = jax.random.normal(k1, (ncrops * batch, out_dim), jnp.float32)
    teacher_output = jax.random.normal(k2, (2 * batch, out_dim), jnp.float32)
    center = jnp.zeros((1, out_dim), jnp.float32)  # register_buffer('center', zeros)

    # row_block=8 exercises the row-block ("parallel") grid axis (2 row blocks).
    loss, new_center = dino_loss_forward(
        student_output, teacher_output, center,
        ncrops=ncrops, student_temp=student_temp,
        teacher_temp=t_temp, center_momentum=center_momentum,
        row_block=8)
    jax.block_until_ready((loss, new_center))

    # Correctness check vs. plain-JAX reference.
    ref = _reference_loss(student_output, teacher_output, center, ncrops,
                          student_temp, t_temp)
    ref_center = (center * center_momentum +
                  (jnp.sum(teacher_output, axis=0, keepdims=True) /
                   teacher_output.shape[0]) * (1.0 - center_momentum))
    assert np.allclose(np.asarray(loss), np.asarray(ref), rtol=1e-4, atol=1e-4), \
        (float(loss), float(ref))
    assert np.allclose(np.asarray(new_center), np.asarray(ref_center),
                       rtol=1e-5, atol=1e-5)

    print("KERNEL_OK")
</pallas_src>

<mosaic_0001>
module attributes {stable_mosaic.version = 11 : i64} {
  func.func @_dino_fused_kernel(%arg0: i32, %arg1: i32, %arg2: memref<2x8x256xf32, #tpu.memory_space<vmem>>, %arg3: memref<1x8x256xf32, #tpu.memory_space<vmem>>, %arg4: memref<1x256xf32, #tpu.memory_space<vmem>>, %arg5: memref<1x1x1xf32, #tpu.memory_space<vmem>>, %arg6: memref<1x1x256xf32, #tpu.memory_space<vmem>>, %arg7: memref<3x8x256xf32, #tpu.memory_space<vmem>>, %arg8: memref<8x1xf32, #tpu.memory_space<vmem>>) attributes {dimension_semantics = [#tpu.dimension_semantics<parallel>, #tpu.dimension_semantics<arbitrary>], iteration_bounds = array<i64: 2, 4>, scalar_prefetch = 0 : i64, scratch_operands = 2 : i64, tpu.core_type = #tpu.core_type<tc>, window_params = [{transform_indices = @transform_0, window_bounds = array<i64: 2, 8, 256>}, {transform_indices = @transform_1, window_bounds = array<i64: 1, 8, 256>}, {pipeline_mode = #tpu.pipeline_mode<synchronous>, transform_indices = @transform_2, window_bounds = array<i64: 1, 256>}, {transform_indices = @transform_3, window_bounds = array<i64: 1, 1, 1>}, {transform_indices = @transform_4, window_bounds = array<i64: 1, 1, 256>}]} {
    %c0_i32 = arith.constant 0 : i32
    %0 = arith.cmpi eq, %arg1, %c0_i32 : i32
    %1 = arith.extui %0 : i1 to i32
    %c0_i32_0 = arith.constant 0 : i32
    %2 = arith.cmpi ne, %1, %c0_i32_0 : i32
    scf.if %2 {
      %c0_16 = arith.constant 0 : index
      %c0_17 = arith.constant 0 : index
      %c0_18 = arith.constant 0 : index
      %34 = vector.load %arg2[%c0_16, %c0_17, %c0_18] : memref<2x8x256xf32, #tpu.memory_space<vmem>>, vector<1x8x256xf32>
      %35 = vector.shape_cast %34 : vector<1x8x256xf32> to vector<8x256xf32>
      %c1 = arith.constant 1 : index
      %c0_19 = arith.constant 0 : index
      %c0_20 = arith.constant 0 : index
      %36 = vector.load %arg2[%c1, %c0_19, %c0_20] : memref<2x8x256xf32, #tpu.memory_space<vmem>>, vector<1x8x256xf32>
      %37 = vector.shape_cast %36 : vector<1x8x256xf32> to vector<8x256xf32>
      %cst_21 = arith.constant dense<0.000000e+00> : vector<256xf32>
      %38 = vector.multi_reduction <add>, %35, %cst_21 [0] : vector<8x256xf32> to vector<256xf32>
      %39 = vector.shape_cast %38 : vector<256xf32> to vector<1x256xf32>
      %cst_22 = arith.constant dense<0.000000e+00> : vector<256xf32>
      %40 = vector.multi_reduction <add>, %37, %cst_22 [0] : vector<8x256xf32> to vector<256xf32>
      %41 = vector.shape_cast %40 : vector<256xf32> to vector<1x256xf32>
      %42 = arith.addf %39, %41 : vector<1x256xf32>
      %c0_23 = arith.constant 0 : index
      %c0_24 = arith.constant 0 : index
      %c0_25 = arith.constant 0 : index
      %43 = vector.load %arg6[%c0_23, %c0_24, %c0_25] : memref<1x1x256xf32, #tpu.memory_space<vmem>>, vector<1x1x256xf32>
      %44 = vector.shape_cast %43 : vector<1x1x256xf32> to vector<1x256xf32>
      %45 = vector.shape_cast %42 : vector<1x256xf32> to vector<1x1x256xf32>
      tpu.vector_store %arg6[%c0_23, %c0_24, %c0_25], %45 {strides = array<i32>} : memref<1x1x256xf32, #tpu.memory_space<vmem>>, vector<1x1x256xf32>,
      %c0_26 = arith.constant 0 : index
      %c0_27 = arith.constant 0 : index
      %46 = vector.load %arg4[%c0_26, %c0_27] : memref<1x256xf32, #tpu.memory_space<vmem>>, vector<1x256xf32>
      %47 = vector.broadcast %46 : vector<1x256xf32> to vector<8x256xf32>
      %48 = arith.subf %35, %47 : vector<8x256xf32>
      %cst_28 = arith.constant 18.181818 : f32
      %49 = vector.broadcast %cst_28 : f32 to vector<8x256xf32>
      %50 = arith.mulf %48, %49 : vector<8x256xf32>
      %cst_29 = arith.constant dense<0xFF800000> : vector<8xf32>
      %51 = vector.multi_reduction <maximumf>, %50, %cst_29 [1] : vector<8x256xf32> to vector<8xf32>
      %52 = vector.shape_cast %51 : vector<8xf32> to vector<8x1xf32>
      %53 = vector.broadcast %52 : vector<8x1xf32> to vector<8x256xf32>
      %54 = arith.subf %50, %53 : vector<8x256xf32>
      %55 = math.exp %54 : vector<8x256xf32>
      %cst_30 = arith.constant dense<0.000000e+00> : vector<8xf32>
      %56 = vector.multi_reduction <add>, %55, %cst_30 [1] : vector<8x256xf32> to vector<8xf32>
      %57 = vector.shape_cast %56 : vector<8xf32> to vector<8x1xf32>
      %cst_31 = arith.constant 1.000000e+00 : f32
      %58 = vector.broadcast %cst_31 : f32 to vector<8x1xf32>
      %59 = arith.divf %58, %57 : vector<8x1xf32>
      %60 = vector.broadcast %59 : vector<8x1xf32> to vector<8x256xf32>
      %61 = arith.mulf %55, %60 : vector<8x256xf32>
      %62 = vector.broadcast %46 : vector<1x256xf32> to vector<8x256xf32>
      %63 = arith.subf %37, %62 : vector<8x256xf32>
      %cst_32 = arith.constant 18.181818 : f32
      %64 = vector.broadcast %cst_32 : f32 to vector<8x256xf32>
      %65 = arith.mulf %63, %64 : vector<8x256xf32>
      %cst_33 = arith.constant dense<0xFF800000> : vector<8xf32>
      %66 = vector.multi_reduction <maximumf>, %65, %cst_33 [1] : vector<8x256xf32> to vector<8xf32>
      %67 = vector.shape_cast %66 : vector<8xf32> to vector<8x1xf32>
      %68 = vector.broadcast %67 : vector<8x1xf32> to vector<8x256xf32>
      %69 = arith.subf %65, %68 : vector<8x256xf32>
      %70 = math.exp %69 : vector<8x256xf32>
      %cst_34 = arith.constant dense<0.000000e+00> : vector<8xf32>
      %71 = vector.multi_reduction <add>, %70, %cst_34 [1] : vector<8x256xf32> to vector<8xf32>
      %72 = vector.shape_cast %71 : vector<8xf32> to vector<8x1xf32>
      %cst_35 = arith.constant 1.000000e+00 : f32
      %73 = vector.broadcast %cst_35 : f32 to vector<8x1xf32>
      %74 = arith.divf %73, %72 : vector<8x1xf32>
      %75 = vector.broadcast %74 : vector<8x1xf32> to vector<8x256xf32>
      %76 = arith.mulf %70, %75 : vector<8x256xf32>
      %c0_36 = arith.constant 0 : index
      %c0_37 = arith.constant 0 : index
      %c0_38 = arith.constant 0 : index
      %77 = vector.load %arg7[%c0_36, %c0_37, %c0_38] : memref<3x8x256xf32, #tpu.memory_space<vmem>>, vector<1x8x256xf32>
      %78 = vector.shape_cast %77 : vector<1x8x256xf32> to vector<8x256xf32>
      %79 = vector.shape_cast %76 : vector<8x256xf32> to vector<1x8x256xf32>
      tpu.vector_store %arg7[%c0_36, %c0_37, %c0_38], %79 {strides = array<i32>} : memref<3x8x256xf32, #tpu.memory_space<vmem>>, vector<1x8x256xf32>,
      %c1_39 = arith.constant 1 : index
      %c0_40 = arith.constant 0 : index
      %c0_41 = arith.constant 0 : index
      %80 = vector.load %arg7[%c1_39, %c0_40, %c0_41] : memref<3x8x256xf32, #tpu.memory_space<vmem>>, vector<1x8x256xf32>
      %81 = vector.shape_cast %80 : vector<1x8x256xf32> to vector<8x256xf32>
      %82 = vector.shape_cast %61 : vector<8x256xf32> to vector<1x8x256xf32>
      tpu.vector_store %arg7[%c1_39, %c0_40, %c0_41], %82 {strides = array<i32>} : memref<3x8x256xf32, #tpu.memory_space<vmem>>, vector<1x8x256xf32>,
      %83 = arith.addf %61, %76 : vector<8x256xf32>
      %c2 = arith.constant 2 : index
      %c0_42 = arith.constant 0 : index
      %c0_43 = arith.constant 0 : index
      %84 = vector.load %arg7[%c2, %c0_42, %c0_43] : memref<3x8x256xf32, #tpu.memory_space<vmem>>, vector<1x8x256xf32>
      %85 = vector.shape_cast %84 : vector<1x8x256xf32> to vector<8x256xf32>
      %86 = vector.shape_cast %83 : vector<8x256xf32> to vector<1x8x256xf32>
      tpu.vector_store %arg7[%c2, %c0_42, %c0_43], %86 {strides = array<i32>} : memref<3x8x256xf32, #tpu.memory_space<vmem>>, vector<1x8x256xf32>,
      %cst_44 = arith.constant 0.000000e+00 : f32
      %87 = vector.broadcast %cst_44 : f32 to vector<8x1xf32>
      %c0_45 = arith.constant 0 : index
      %c0_46 = arith.constant 0 : index
      %88 = vector.load %arg8[%c0_45, %c0_46] : memref<8x1xf32, #tpu.memory_space<vmem>>, vector<8x1xf32>
      tpu.vector_store %arg8[%c0_45, %c0_46], %87 {strides = array<i32>} : memref<8x1xf32, #tpu.memory_space<vmem>>, vector<8x1xf32>,
    } else {
    }
    %c0 = arith.constant 0 : index
    %c0_1 = arith.constant 0 : index
    %c0_2 = arith.constant 0 : index
    %3 = vector.load %arg3[%c0, %c0_1, %c0_2] : memref<1x8x256xf32, #tpu.memory_space<vmem>>, vector<1x8x256xf32>
    %4 = vector.shape_cast %3 : vector<1x8x256xf32> to vector<8x256xf32>
    %cst = arith.constant 1.000000e+01 : f32
    %5 = vector.broadcast %cst : f32 to vector<8x256xf32>
    %6 = arith.mulf %4, %5 : vector<8x256xf32>
    %cst_3 = arith.constant dense<0xFF800000> : vector<8xf32>
    %7 = vector.multi_reduction <maximumf>, %6, %cst_3 [1] : vector<8x256xf32> to vector<8xf32>
    %8 = vector.shape_cast %7 : vector<8xf32> to vector<8x1xf32>
    %9 = vector.broadcast %8 : vector<8x1xf32> to vector<8x256xf32>
    %10 = arith.subf %6, %9 : vector<8x256xf32>
    %11 = math.exp %10 : vector<8x256xf32>
    %cst_4 = arith.constant dense<0.000000e+00> : vector<8xf32>
    %12 = vector.multi_reduction <add>, %11, %cst_4 [1] : vector<8x256xf32> to vector<8xf32>
    %13 = vector.shape_cast %12 : vector<8xf32> to vector<8x1xf32>
    %14 = math.log %13 : vector<8x1xf32>
    %15 = arith.addf %8, %14 : vector<8x1xf32>
    %c2_i32 = arith.constant 2 : i32
    %16 = arith.minsi %arg1, %c2_i32 : i32
    %17 = arith.index_cast %16 : i32 to index
    %c0_5 = arith.constant 0 : index
    %c0_6 = arith.constant 0 : index
    %18 = vector.load %arg7[%17, %c0_5, %c0_6] : memref<3x8x256xf32, #tpu.memory_space<vmem>>, vector<1x8x256xf32>
    %19 = vector.shape_cast %18 : vector<1x8x256xf32> to vector<8x256xf32>
    %20 = arith.mulf %19, %6 : vector<8x256xf32>
    %cst_7 = arith.constant dense<0.000000e+00> : vector<8xf32>
    %21 = vector.multi_reduction <add>, %20, %cst_7 [1] : vector<8x256xf32> to vector<8xf32>
    %22 = vector.shape_cast %21 : vector<8xf32> to vector<8x1xf32>
    %c2_i32_8 = arith.constant 2 : i32
    %23 = arith.cmpi sge, %arg1, %c2_i32_8 : i32
    %cst_9 = arith.constant 2.000000e+00 : f32
    %cst_10 = arith.constant 1.000000e+00 : f32
    %24 = arith.select %23, %cst_9, %cst_10 : f32
    %c0_11 = arith.constant 0 : index
    %c0_12 = arith.constant 0 : index
    %25 = vector.load %arg8[%c0_11, %c0_12] : memref<8x1xf32, #tpu.memory_space<vmem>>, vector<8x1xf32>
    %26 = vector.broadcast %24 : f32 to vector<8x1xf32>
    %27 = arith.mulf %26, %15 : vector<8x1xf32>
    %28 = arith.addf %25, %27 : vector<8x1xf32>
    %29 = arith.subf %28, %22 : vector<8x1xf32>
    %c0_13 = arith.constant 0 : index
    %c0_14 = arith.constant 0 : index
    %30 = vector.load %arg8[%c0_13, %c0_14] : memref<8x1xf32, #tpu.memory_space<vmem>>, vector<8x1xf32>
    tpu.vector_store %arg8[%c0_13, %c0_14], %29 {strides = array<i32>} : memref<8x1xf32, #tpu.memory_space<vmem>>, vector<8x1xf32>,
    %c3_i32 = arith.constant 3 : i32
    %31 = arith.cmpi eq, %arg1, %c3_i32 : i32
    %32 = arith.extui %31 : i1 to i32
    %c0_i32_15 = arith.constant 0 : i32
    %33 = arith.cmpi ne, %32, %c0_i32_15 : i32
    scf.if %33 {
      %c0_16 = arith.constant 0 : index
      %c0_17 = arith.constant 0 : index
      %34 = vector.load %arg8[%c0_16, %c0_17] : memref<8x1xf32, #tpu.memory_space<vmem>>, vector<8x1xf32>
      %35 = vector.shape_cast %34 : vector<8x1xf32> to vector<1x8x1xf32>
      %cst_18 = arith.constant dense<0.000000e+00> : vector<1xf32>
      %36 = vector.multi_reduction <add>, %35, %cst_18 [1, 2] : vector<1x8x1xf32> to vector<1xf32>
      %37 = vector.shape_cast %36 : vector<1xf32> to vector<1x1x1xf32>
      %38 = vector.extract %37[0, 0, 0] : f32 from vector<1x1x1xf32>
      %39 = vector.broadcast %38 : f32 to vector<1x1xf32>
      %cst_19 = arith.constant 0.010416667 : f32
      %40 = vector.broadcast %cst_19 : f32 to vector<1x1xf32>
      %41 = arith.mulf %39, %40 : vector<1x1xf32>
      %c0_20 = arith.constant 0 : index
      %c0_21 = arith.constant 0 : index
      %c0_22 = arith.constant 0 : index
      %42 = vector.load %arg5[%c0_20, %c0_21, %c0_22] : memref<1x1x1xf32, #tpu.memory_space<vmem>>, vector<1x1x1xf32>
      %43 = vector.shape_cast %42 : vector<1x1x1xf32> to vector<1x1xf32>
      %44 = vector.shape_cast %41 : vector<1x1xf32> to vector<1x1x1xf32>
      tpu.vector_store %arg5[%c0_20, %c0_21, %c0_22], %44 {strides = array<i32>} : memref<1x1x1xf32, #tpu.memory_space<vmem>>, vector<1x1x1xf32>,
    } else {
    }
    return
  }
  func.func @transform_0(%arg0: i32, %arg1: i32) -> (i32, i32, i32) {
    %c0_i32 = arith.constant 0 : i32
    %c0_i32_0 = arith.constant 0 : i32
    %c0_i32_1 = arith.constant 0 : i32
    return %c0_i32, %arg0, %c0_i32_0 : i32, i32, i32
  }
  func.func @transform_1(%arg0: i32, %arg1: i32) -> (i32, i32, i32) {
    %c0_i32 = arith.constant 0 : i32
    %c0_i32_0 = arith.constant 0 : i32
    return %arg1, %arg0, %c0_i32 : i32, i32, i32
  }
  func.func @transform_2(%arg0: i32, %arg1: i32) -> (i32, i32) {
    %c0_i32 = arith.constant 0 : i32
    %c0_i32_0 = arith.constant 0 : i32
    %c0_i32_1 = arith.constant 0 : i32
    return %c0_i32, %c0_i32_0 : i32, i32
  }
  func.func @transform_3(%arg0: i32, %arg1: i32) -> (i32, i32, i32) {
    %c0_i32 = arith.constant 0 : i32
    %c0_i32_0 = arith.constant 0 : i32
    %c0_i32_1 = arith.constant 0 : i32
    return %arg0, %c0_i32, %c0_i32_0 : i32, i32, i32
  }
  func.func @transform_4(%arg0: i32, %arg1: i32) -> (i32, i32, i32) {
    %c0_i32 = arith.constant 0 : i32
    %c0_i32_0 = arith.constant 0 : i32
    %c0_i32_1 = arith.constant 0 : i32
    return %arg0, %c0_i32, %c0_i32_0 : i32, i32, i32
  }
}

</mosaic_0001>

<llo_original>
// kernel: tpu_custom_call.1
$region0: #{tpu_custom_call.1}
  #allocation0 [shape = 'u32[]', space=smem, size = 0x4, offset = 0x4, fixed_abs, tag = 'smem constant byte address 0x4 - core index']
  #allocation1 [shape = 'u32[72,128]{1,0:T(1,128)}', space=vmem, size = 0x9000, scoped, tag = 'internal scratch']
  #allocation2 [shape = 'f32[3,8,256]{2,1,0:T(8,128)}', space=vmem, size = 0x6000, scoped, tag = 'scratch operand']
  #allocation3 [shape = 'f32[8,1]{1,0:T(8,128)}', space=vmem, size = 0x1000, scoped, tag = 'scratch operand']
  %s0 = inlined_call_operand.hbm [shape: f32[2,16,256], index: 0, kind: input, shape index: {}]
  %s1 = inlined_call_operand.hbm [shape: f32[4,16,256], index: 1, kind: input, shape index: {}]
  %s2 = inlined_call_operand.hbm [shape: f32[1,256], index: 2, kind: input, shape index: {}]
  %s3 = inlined_call_operand.vmem [shape: f32[2,1,1], index: 3, kind: output, shape index: {0}]
  %s4 = inlined_call_operand.hbm [shape: f32[2,1,256], index: 4, kind: output, shape index: {1}]
  %5 = xla_tuple %s3, %s4
  %s6 = sld [smem:[#allocation0]]
  $region73: #{tpu_custom_call.1} parent=0
    _
  %s8 = ssub.s32 1, %s6
  %s9 = scalar_select 0, %s8, %s6
  $region1: #{tpu_custom_call.1} parent=0
    #allocation4 [shape = 'u8[32768]{0}', space=vmem, size = 0x8000, scoped, tag = 'input window, operand 0']
    #allocation5 [shape = 's32[2]{0}', space=sflag, size = 0x8, scoped, tag = 'scoped memory for tpu_custom_call.1']
    #allocation6 [shape = 's32[2]{0}', space=sflag, size = 0x8, scoped, tag = 'scoped memory for tpu_custom_call.1']
    #allocation7 [shape = 'u8[16384]{0}', space=vmem, size = 0x4000, scoped, tag = 'input window, operand 1']
    #allocation8 [shape = 's32[2]{0}', space=sflag, size = 0x8, scoped, tag = 'scoped memory for tpu_custom_call.1']
    #allocation9 [shape = 'u8[1024]{0}', space=vmem, size = 0x400, scoped, tag = 'input window, operand 2, single buffered']
    #allocation10 [shape = 'u8[2048]{0}', space=vmem, size = 0x800, scoped, tag = 'output window, operand 1']
    %10 = vsyncpa [#allocation5], 0
    %s11 = scalar_lea.sflag [#allocation5], 1
    %12 = vsyncpa %s11, 0
    %13 = vsyncpa [#allocation8], 0
    %s14 = scalar_lea.sflag [#allocation8], 1
    %15 = vsyncpa %s14, 0
    %16 = vsyncpa [#allocation6], 0
    %s17 = scalar_lea.sflag [#allocation6], 1
    %18 = vsyncpa %s17, 0
    loop: start=0, step=1, limit=10
    $region2: #{tpu_custom_call.1} parent=1 // loop_pre_header
      _
    $region3: #{tpu_custom_call.1} parent=1 // loop_header
      %s20 = sphi 0, %s24
      %p21 = scmp.ge.s32.totalorder %s20, 10
      %s27 = sphi 0, %s39
      %s28 = sphi 0, %s35
      %s29 = sphi 0, %s27
      %s30 = sphi 0, %s28
      %s31 = sphi 0, %s29
      %s32 = sphi 0, %s30
      %s42 = sphi 0, %s44
      %s45 = sphi 0, %s42
      %s46 = sphi 0, %s45
      %s62 = sphi 0, %s46
      %s70 = sphi 0, %s72
      %s73 = sphi 0, %s70
      %s74 = sphi 0, %s73
      %s90 = sphi 0, %s74
      %s94 = sphi 0, %s94
      %s96 = sphi 0, %s94
      %s97 = sphi 0, %s96
      %s111 = sphi 0, %s97
      %s117 = sphi 0, %s119
      %s120 = sphi 0, %s117
      %s121 = sphi 0, %s120
      %s137 = sphi 0, %s121
      %s143 = sphi 0, %s145
      %s146 = sphi 0, %s143
      %s147 = sphi 0, %s146
      %s163 = sphi 0, %s147
    $region4: #{tpu_custom_call.1} parent=1 // loop_header_branch
      %23 = sbr.rel (%p21) target = $region8
    $region5: #{tpu_custom_call.1} parent=1 // loop_body
      %s25 = ssub.s32 %s20, 1
      %s26 = ssub.s32 %s20, 2
      %s33 = sadd.s32 1, %s28
      %p34 = scmp.ge.s32.totalorder %s33, 4
      %s35 = scalar_select %p34, 0, %s33
      %s36 = sadd.s32 1, %s27
      %s37 = scalar_select %p34, %s36, %s27
      %p38 = scmp.ge.s32.totalorder %s37, 2
      %s39 = scalar_select %p38, 0, %s37
      %s40 = ssub.s32 %s27, %s39
      %p41 = scmp.eq.s32.totalorder %s40, 0
      %s43 = sadd.s32 %s42, 1
      %s44 = scalar_select %p41, %s42, %s43
      %p47 = pneg %p41
      %p48 = scmp.eq.s32.totalorder %s20, 7
      %p49 = por %p47, %p48
      %p50 = scmp.ne.s32.totalorder %s42, %s45
      %p51 = scmp.eq.s32.totalorder %s20, 0
      %p52 = por %p50, %p51
      %p53 = scmp.ne.s32.totalorder %s42, %s45
      %p54 = scmp.eq.s32.totalorder %s25, 7
      %p55 = por %p53, %p54
      %p56 = scmp.ne.s32.totalorder %s45, %s46
      %p57 = scmp.eq.s32.totalorder %s25, 0
      %p58 = por %p56, %p57
      %p59 = scmp.ne.s32.totalorder %s45, %s46
      %p60 = scmp.eq.s32.totalorder %s26, 7
      %p61 = por %p59, %p60
      %p63 = scmp.ne.s32.totalorder %s46, %s62
      %p64 = scmp.eq.s32.totalorder %s26, 0
      %p65 = por %p63, %p64
      %s66 = ssub.s32 %s28, %s35
      %s67 = ssub.s32 %s27, %s39
      %s68 = sor.u32 %s66, %s67
      %p69 = scmp.eq.s32.totalorder %s68, 0
      %s71 = sadd.s32 %s70, 1
      %s72 = scalar_select %p69, %s70, %s71
      %p75 = pneg %p69
      %p76 = scmp.eq.s32.totalorder %s20, 7
      %p77 = por %p75, %p76
      %p78 = scmp.ne.s32.totalorder %s70, %s73
      %p79 = scmp.eq.s32.totalorder %s20, 0
      %p80 = por %p78, %p79
      %p81 = scmp.ne.s32.totalorder %s70, %s73
      %p82 = scmp.eq.s32.totalorder %s25, 7
      %p83 = por %p81, %p82
      %p84 = scmp.ne.s32.totalorder %s73, %s74
      %p85 = scmp.eq.s32.totalorder %s25, 0
      %p86 = por %p84, %p85
      %p87 = scmp.ne.s32.totalorder %s73, %s74
      %p88 = scmp.eq.s32.totalorder %s26, 7
      %p89 = por %p87, %p88
      %p91 = scmp.ne.s32.totalorder %s74, %s90
      %p92 = scmp.eq.s32.totalorder %s26, 0
      %p93 = por %p91, %p92
      %s95 = sadd.s32 %s94, 1
      %p98 = scmp.eq.s32.totalorder %s20, 7
      %p99 = scmp.ne.s32.totalorder %s94, %s96
      %p100 = scmp.eq.s32.totalorder %s20, 0
      %p101 = por %p99, %p100
      %p102 = scmp.ne.s32.totalorder %s94, %s96
      %p103 = scmp.eq.s32.totalorder %s25, 7
      %p104 = por %p102, %p103
      %p105 = scmp.ne.s32.totalorder %s96, %s97
      %p106 = scmp.eq.s32.totalorder %s25, 0
      %p107 = por %p105, %p106
      %p108 = scmp.ne.s32.totalorder %s96, %s97
      %p109 = scmp.eq.s32.totalorder %s26, 7
      %p110 = por %p108, %p109
      %p112 = scmp.ne.s32.totalorder %s97, %s111
      %p113 = scmp.eq.s32.totalorder %s26, 0
      %p114 = por %p112, %p113
      %s115 = ssub.s32 %s27, %s39
      %p116 = scmp.eq.s32.totalorder %s115, 0
      %s118 = sadd.s32 %s117, 1
      %s119 = scalar_select %p116, %s117, %s118
      %p122 = pneg %p116
      %p123 = scmp.eq.s32.totalorder %s20, 7
      %p124 = por %p122, %p123
      %p125 = scmp.ne.s32.totalorder %s117, %s120
      %p126 = scmp.eq.s32.totalorder %s20, 0
      %p127 = por %p125, %p126
      %p128 = scmp.ne.s32.totalorder %s117, %s120
      %p129 = scmp.eq.s32.totalorder %s25, 7
      %p130 = por %p128, %p129
      %p131 = scmp.ne.s32.totalorder %s120, %s121
      %p132 = scmp.eq.s32.totalorder %s25, 0
      %p133 = por %p131, %p132
      %p134 = scmp.ne.s32.totalorder %s120, %s121
      %p135 = scmp.eq.s32.totalorder %s26, 7
      %p136 = por %p134, %p135
      %p138 = scmp.ne.s32.totalorder %s121, %s137
      %p139 = scmp.eq.s32.totalorder %s26, 0
      %p140 = por %p138, %p139
      %s141 = ssub.s32 %s27, %s39
      %p142 = scmp.eq.s32.totalorder %s141, 0
      %s144 = sadd.s32 %s143, 1
      %s145 = scalar_select %p142, %s143, %s144
      %p148 = pneg %p142
      %p149 = scmp.eq.s32.totalorder %s20, 7
      %p150 = por %p148, %p149
      %p151 = scmp.ne.s32.totalorder %s143, %s146
      %p152 = scmp.eq.s32.totalorder %s20, 0
      %p153 = por %p151, %p152
      %p154 = scmp.ne.s32.totalorder %s143, %s146
      %p155 = scmp.eq.s32.totalorder %s25, 7
      %p156 = por %p154, %p155
      %p157 = scmp.ne.s32.totalorder %s146, %s147
      %p158 = scmp.eq.s32.totalorder %s25, 0
      %p159 = por %p157, %p158
      %p160 = scmp.ne.s32.totalorder %s146, %s147
      %p161 = scmp.eq.s32.totalorder %s26, 7
      %p162 = por %p160, %p161
      %p164 = scmp.ne.s32.totalorder %s147, %s163
      %p165 = scmp.eq.s32.totalorder %s26, 0
      %p166 = por %p164, %p165
      %p167 = scmp.le.s32.totalorder 1, %s20
      %p168 = scmp.lt.s32.totalorder %s20, 9
      %p169 = pnand %p167, %p168
      %p170 = pneg %p169
      // Predicated region
      $region9: #{tpu_custom_call.1} parent=5 // pred_check
        _
      $region10: #{tpu_custom_call.1} parent=5 // pred_check_branch
        %172 = sbr.rel (%p169) target = $region12
      $region11: #{tpu_custom_call.1} parent=5 // pred_region
        %s173 = ssub.s32 %s20, 1
        // Predicated region
        $region13: #{tpu_custom_call.1} parent=11 // pred_check
          %p174 = pneg %p107
        $region14: #{tpu_custom_call.1} parent=11 // pred_check_branch
          %176 = sbr.rel (%p174) target = $region16
        $region15: #{tpu_custom_call.1} parent=11 // pred_region
          %178 = vsyncadd [#allocation8], 0
          %s180 = sshll.u32 %s2, 4
          %s181 = int_to_ptr.hbm [resolvable:$true] %s180
          %s182 = sshll.u32 [#allocation9], 4
          %s183 = int_to_ptr.vmem [resolvable:$true] %s182
          %185 = dma.hbm_to_vmem [thread:$0]  %s181, 32, %s183, [#allocation8]
        $region16: #{tpu_custom_call.1} parent=11 // pred_fallthru
          _
      $region12: #{tpu_custom_call.1} parent=5 // pred_fallthru
        _
      %p186 = scmp.lt.s32.totalorder %s20, 8
      // Predicated region
      $region17: #{tpu_custom_call.1} parent=5 // pred_check
        %p187 = pneg %p186
      $region18: #{tpu_custom_call.1} parent=5 // pred_check_branch
        %189 = sbr.rel (%p187) target = $region20
      $region19: #{tpu_custom_call.1} parent=5 // pred_region
        // Predicated region
        $region21: #{tpu_custom_call.1} parent=19 // pred_check
          %p190 = pneg %p52
        $region22: #{tpu_custom_call.1} parent=19 // pred_check_branch
          %192 = sbr.rel (%p190) target = $region24
        $region23: #{tpu_custom_call.1} parent=19 // pred_region
          %s193 = sand.u32 %s42, 1
          %s194 = scalar_lea.sflag [#allocation5], %s193
          %s195 = sand.u32 %s42, 1
          %s196 = smul.addr %s195, 32
          %s197 = scalar_lea.vmem [#allocation4], %s196
          %199 = vsyncadd %s194, 0
          %s200 = smul.addr %s27, 2
          %s201 = smul.addr %s200, 8
          %s202 = scalar_lea.hbm %s0, %s201
          %s203 = sshll.u32 %s202, 4
          %s204 = int_to_ptr.hbm [resolvable:$true] %s203
          %s205 = sshll.u32 %s197, 4
          %s206 = int_to_ptr.vmem [resolvable:$true] %s205
          %211 = dma.hbm_to_vmem [thread:$0]  %s204, 512, %s206, %s194, 512, 256, 16
        $region24: #{tpu_custom_call.1} parent=19 // pred_fallthru
          _
        // Predicated region
        $region25: #{tpu_custom_call.1} parent=19 // pred_check
          %p212 = pneg %p80
        $region26: #{tpu_custom_call.1} parent=19 // pred_check_branch
          %214 = sbr.rel (%p212) target = $region28
        $region27: #{tpu_custom_call.1} parent=19 // pred_region
          %s215 = sand.u32 %s20, 1
          %s216 = scalar_lea.sflag [#allocation8], %s215
          %s217 = sand.u32 %s70, 1
          %s218 = smul.addr %s217, 16
          %s219 = scalar_lea.vmem [#allocation7], %s218
          %221 = vsyncadd %s216, 0
          %s222 = smul.addr %s27, 2
          %s223 = smul.addr %s28, 4
          %s224 = sadd.s32 %s222, %s223
          %s225 = smul.addr %s224, 8
          %s226 = scalar_lea.hbm %s1, %s225
          %s228 = sshll.u32 %s226, 4
          %s229 = int_to_ptr.hbm [resolvable:$true] %s228
          %s230 = sshll.u32 %s219, 4
          %s231 = int_to_ptr.vmem [resolvable:$true] %s230
          %233 = dma.hbm_to_vmem [thread:$0]  %s229, 256, %s231, %s216
        $region28: #{tpu_custom_call.1} parent=19 // pred_fallthru
          _
      $region20: #{tpu_custom_call.1} parent=5 // pred_fallthru
        _
      %p234 = scmp.le.s32.totalorder 1, %s20
      %p235 = scmp.lt.s32.totalorder %s20, 9
      %p236 = pnand %p234, %p235
      %p237 = pneg %p236
      // Predicated region
      $region29: #{tpu_custom_call.1} parent=5 // pred_check
        _
      $region30: #{tpu_custom_call.1} parent=5 // pred_check_branch
        %239 = sbr.rel (%p236) target = $region32
      $region31: #{tpu_custom_call.1} parent=5 // pred_region
        %s240 = ssub.s32 %s20, 1
        %s241 = sand.u32 %s45, 1
        %s242 = scalar_lea.sflag [#allocation5], %s241
        %s243 = sand.u32 %s45, 1
        %s244 = smul.addr %s243, 32
        %s245 = scalar_lea.vmem [#allocation4], %s244
        // Predicated region
        $region33: #{tpu_custom_call.1} parent=31 // pred_check
          %p246 = pneg %p58
        $region34: #{tpu_custom_call.1} parent=31 // pred_check_branch
          %248 = sbr.rel (%p246) target = $region36
        $region35: #{tpu_custom_call.1} parent=31 // pred_region
          %250 = dma.done %s242, 512
        $region36: #{tpu_custom_call.1} parent=31 // pred_fallthru
          _
        %s251 = sand.u32 %s25, 1
        %s252 = scalar_lea.sflag [#allocation8], %s251
        %s253 = sand.u32 %s73, 1
        %s254 = smul.addr %s253, 16
        %s255 = scalar_lea.vmem [#allocation7], %s254
        // Predicated region
        $region37: #{tpu_custom_call.1} parent=31 // pred_check
          %p256 = pneg %p86
        $region38: #{tpu_custom_call.1} parent=31 // pred_check_branch
          %258 = sbr.rel (%p256) target = $region40
        $region39: #{tpu_custom_call.1} parent=31 // pred_region
          %260 = dma.done %s252, 256
        $region40: #{tpu_custom_call.1} parent=31 // pred_fallthru
          _
        // Predicated region
        $region41: #{tpu_custom_call.1} parent=31 // pred_check
          %p261 = pneg %p107
        $region42: #{tpu_custom_call.1} parent=31 // pred_check_branch
          %263 = sbr.rel (%p261) target = $region44
        $region43: #{tpu_custom_call.1} parent=31 // pred_region
          %265 = dma.done [#allocation8], 32
        $region44: #{tpu_custom_call.1} parent=31 // pred_fallthru
          _
        %s266 = sand.u32 %s45, 1
        %s267 = scalar_lea.sflag [#allocation5], %s266
        %s268 = sand.u32 %s45, 1
        %s269 = smul.addr %s268, 32
        %s270 = scalar_lea.vmem [#allocation4], %s269
        %p271 = pneg %p58
        %p272 = pneg %p55
        %s273 = sand.u32 %s25, 1
        %s274 = scalar_lea.sflag [#allocation8], %s273
        %s275 = sand.u32 %s73, 1
        %s276 = smul.addr %s275, 16
        %s277 = scalar_lea.vmem [#allocation7], %s276
        %p278 = pneg %p86
        %p279 = pneg %p83
        %p280 = pneg %p107
        %p281 = pneg %p104
        %p282 = pneg %p133
        %p283 = pneg %p130
        %p284 = scmp.lt.s32.totalorder %s29, 1
        %s285 = scalar_select %p284, %s29, 1
        %s286 = scalar_lea.vmem %s3, %s285
        %p287 = pneg %p159
        %p288 = pneg %p156
        %s289 = sand.u32 %s146, 1
        %s290 = scalar_lea.sflag [#allocation6], %s289
        %s291 = sand.u32 %s146, 1
        %s292 = smul.addr %s291, 2
        %s293 = scalar_lea.vmem [#allocation10], %s292
        %p294 = scmp.lt.s32.totalorder %s29, 1
        %s295 = scalar_select %p294, %s29, 1
        %s296 = scalar_lea.vmem %s3, %s295
        %p297 = scmp.eq.s32.totalorder %s30, 0
        // Predicated region
        $region45: #{tpu_custom_call.1} parent=31 // pred_check
          %p298 = pneg %p297
        $region46: #{tpu_custom_call.1} parent=31 // pred_check_branch
          %300 = sbr.rel (%p298) target = $region48
        $region47: #{tpu_custom_call.1} parent=31 // pred_region
          %v301 = vld [vmem:[%s245] sm:$0xff]
          %v302 = vld [vmem:[%s245 + $0x8] sm:$0xff]
          %s303 = scalar_lea.vmem %s245, 16 [#allocation4]
          %v304 = vld [vmem:[%s303] sm:$0xff]
          %v305 = vld [vmem:[%s303 + $0x8] sm:$0xff]
          %v306 = vrot.slane %v301, 4
          %v307 = vadd.f32 %v301, %v306
          %v308 = vrot.slane %v307, 2
          %v309 = vadd.f32 %v307, %v308
          %v310 = vrot.slane %v309, 1
          %v311 = vadd.f32 %v309, %v310
          %v312 = vrot.slane %v302, 4
          %v313 = vadd.f32 %v302, %v312
          %v314 = vrot.slane %v313, 2
          %v315 = vadd.f32 %v313, %v314
          %v316 = vrot.slane %v315, 1
          %v317 = vadd.f32 %v315, %v316
          %v318 = vrot.slane %v304, 4
          %v319 = vadd.f32 %v304, %v318
          %v320 = vrot.slane %v319, 2
          %v321 = vadd.f32 %v319, %v320
          %v322 = vrot.slane %v321, 1
          %v323 = vadd.f32 %v321, %v322
          %v324 = vrot.slane %v305, 4
          %v325 = vadd.f32 %v305, %v324
          %v326 = vrot.slane %v325, 2
          %v327 = vadd.f32 %v325, %v326
          %v328 = vrot.slane %v327, 1
          %v329 = vadd.f32 %v327, %v328
          %v330 = vadd.f32 %v311, %v323
          %v331 = vadd.f32 %v317, %v329
          %v334 = vrot.slane %v331, 7
          %vm335 = vcmask 1040384
          %v336 = vsel %vm335, %v330, %v334
          %v338 = vlaneseq
          %vm339 = vcmp.ge.s32.totalorder %v338, 0
          %vm340 = vcmp.lt.s32.totalorder %v338, 256
          %vm341 = vmand %vm339, %vm340
          %342 = vst.msk [vmem:[%s293] sm:$0x3] %vm341, %v336
          %v343 = vld [vmem:[#allocation9] sm:$0x3]
          %v345 = vperm.slane %v343, 0
          %v346 = vperm.slane %v343, 1
          %v349 = vsub.f32 %v301, %v345
          %v350 = vsub.f32 %v302, %v346
          %v351 = vmul.f32 %v349, 18.181818
          %v352 = vmul.f32 %v350, 18.181818
          %v353 = vmax.f32 %v351, %v352
          %354 = vmax.xlane.f32.xlu0 %v353
          %v355 = vpop.xlane.xlu0 %354
          %v356 = vsub.f32 %v351, %v355
          %v357 = vsub.f32 %v352, %v355
          %v358 = vmul.f32 %v356, 1.442695
          %v359 = vpow.pop %v358
          %v360 = vmul.f32 %v357, 1.442695
          %v361 = vpow.pop %v360
          %v362 = vadd.f32 %v359, %v361
          %363 = vadd.xlane.f32.xlu0 %v362
          %v364 = vpop.xlane.xlu0 %363
          %v365 = vrcp.pop %v364
          %v366 = vmul.f32 %v364, %v365
          %v367 = vsub.f32 1.0, %v366
          %v368 = vmul.f32 %v365, %v367
          %v369 = vadd.f32 %v365, %v368
          %vm370 = vweird.f32 %v364
          %vm371 = vweird.f32 %v365
          %vm372 = vmor %vm370, %vm371
          %v373 = vsel %vm372, %v365, %v369
          %v374 = vand.u32 2147483647, %v364
          %vm375 = vcmp.eq.f32.partialorder %v374, 8.507059e+37
          %v376 = vand.u32 %v364, 2147483648
          %v377 = vor.u32 1.1754944e-38, %v376
          %v378 = vsel %vm375, %v377, %v373
          %v379 = vmul.f32 1.0, %v378
          %v380 = vmul.f32 %v359, %v379
          %v381 = vmul.f32 %v361, %v379
          %v382 = vsub.f32 %v304, %v345
          %v383 = vsub.f32 %v305, %v346
          %v384 = vmul.f32 %v382, 18.181818
          %v385 = vmul.f32 %v383, 18.181818
          %v386 = vmax.f32 %v384, %v385
          %387 = vmax.xlane.f32.xlu0 %v386
          %v388 = vpop.xlane.xlu0 %387
          %v389 = vsub.f32 %v384, %v388
          %v390 = vsub.f32 %v385, %v388
          %v391 = vmul.f32 %v389, 1.442695
          %v392 = vpow.pop %v391
          %v393 = vmul.f32 %v390, 1.442695
          %v394 = vpow.pop %v393
          %v395 = vadd.f32 %v392, %v394
          %396 = vadd.xlane.f32.xlu0 %v395
          %v397 = vpop.xlane.xlu0 %396
          %v398 = vrcp.pop %v397
          %v399 = vmul.f32 %v397, %v398
          %v400 = vsub.f32 1.0, %v399
          %v401 = vmul.f32 %v398, %v400
          %v402 = vadd.f32 %v398, %v401
          %vm403 = vweird.f32 %v397
          %vm404 = vweird.f32 %v398
          %vm405 = vmor %vm403, %vm404
          %v406 = vsel %vm405, %v398, %v402
          %v407 = vand.u32 2147483647, %v397
          %vm408 = vcmp.eq.f32.partialorder %v407, 8.507059e+37
          %v409 = vand.u32 %v397, 2147483648
          %v410 = vor.u32 1.1754944e-38, %v409
          %v411 = vsel %vm408, %v410, %v406
          %v412 = vmul.f32 1.0, %v411
          %v413 = vmul.f32 %v392, %v412
          %v414 = vmul.f32 %v394, %v412
          %415 = vst [vmem:[#allocation2] sm:$0xff] %v413
          %416 = vst [vmem:[#allocation2 + $0x8] sm:$0xff] %v414
          %s417 = scalar_lea.vmem [#allocation2], 16
          %418 = vst [vmem:[%s417] sm:$0xff] %v380
          %419 = vst [vmem:[%s417 + $0x8] sm:$0xff] %v381
          %v420 = vadd.f32 %v380, %v413
          %v421 = vadd.f32 %v381, %v414
          %s422 = scalar_lea.vmem [#allocation2], 32
          %423 = vst [vmem:[%s422] sm:$0xff] %v420
          %424 = vst [vmem:[%s422 + $0x8] sm:$0xff] %v421
          %vm425 = vcmask 7168
          %426 = vst.msk [vmem:[#allocation3] sm:$0xff] %vm425, 0.0
        $region48: #{tpu_custom_call.1} parent=31 // pred_fallthru
          _
        %v427 = vld [vmem:[%s255] sm:$0xff]
        %v428 = vld [vmem:[%s255 + $0x8] sm:$0xff]
        %v429 = vmul.f32 %v427, 10.0
        %v430 = vmul.f32 %v428, 10.0
        %v431 = vmax.f32 %v429, %v430
        %432 = vmax.xlane.f32.xlu0 %v431
        %v433 = vpop.xlane.xlu0 %432
        %v434 = vsub.f32 %v429, %v433
        %v435 = vsub.f32 %v430, %v433
        %v436 = vmul.f32 %v434, 1.442695
        %v437 = vpow.pop %v436
        %v438 = vmul.f32 %v435, 1.442695
        %v439 = vpow.pop %v438
        %v440 = vadd.f32 %v437, %v439
        %441 = vadd.xlane.f32.xlu0 %v440
        %v442 = vpop.xlane.xlu0 %441
        %v443 = vlog2.pop %v442
        %v444 = vmul.f32 %v443, 0.6931472
        %v445 = vadd.f32 %v433, %v444
        %p446 = scmp.lt.s32.totalorder %s30, 2
        %s447 = scalar_select %p446, %s30, 2
        %s448 = smul.u32 %s447, 2
        %s449 = smul.addr %s448, 8
        %s450 = scalar_lea.vmem [#allocation2], %s449
        %v451 = vld [vmem:[%s450] sm:$0xff]
        %v452 = vld [vmem:[%s450 + $0x8] sm:$0xff]
        %v453 = vmul.f32 %v451, %v429
        %v454 = vmul.f32 %v452, %v430
        %v455 = vadd.f32 %v453, %v454
        %456 = vadd.xlane.f32.xlu0 %v455
        %v457 = vpop.xlane.xlu0 %456
        %p458 = scmp.ge.s32.totalorder %s30, 2
        %s459 = scalar_select %p458, 2.0, 1.0
        %v460 = vld [vmem:[#allocation3] sm:$0xff]
        %v461 = vstv %s459
        %v462 = vmul.f32 %v461, %v445
        %v463 = vadd.f32 %v460, %v462
        %v464 = vsub.f32 %v463, %v457
        %vm465 = vcmask 7168
        %466 = vst.msk [vmem:[#allocation3] sm:$0xff] %vm465, %v464
        %p467 = scmp.eq.s32.totalorder %s30, 3
        // Predicated region
        $region49: #{tpu_custom_call.1} parent=31 // pred_check
          %p468 = pneg %p467
        $region50: #{tpu_custom_call.1} parent=31 // pred_check_branch
          %470 = sbr.rel (%p468) target = $region52
        $region51: #{tpu_custom_call.1} parent=31 // pred_region
          %v471 = vld [vmem:[#allocation3] sm:$0xff]
          %v472 = vsel %vm465, %v471, 0.0
          %473 = vadd.xlane.f32.xlu0 %v472
          %v474 = vpop.xlane.xlu0 %473
          %v475 = vrot.slane %v474, 4
          %v476 = vadd.f32 %v474, %v475
          %v477 = vrot.slane %v476, 2
          %v478 = vadd.f32 %v476, %v477
          %v479 = vrot.slane %v478, 1
          %v480 = vadd.f32 %v478, %v479
          %s481 = vtos %v480
          %v482 = vstv %s481
          %v483 = vmul.f32 %v482, 0.010416667
          %vm484 = vcmask 0
          %485 = vst.msk [vmem:[%s296] sm:$0x1] %vm484, %v483
        $region52: #{tpu_custom_call.1} parent=31 // pred_fallthru
          _
        %p486 = scmp.lt.s32.totalorder %s29, 1
        %s487 = scalar_select %p486, %s29, 1
        %s488 = scalar_lea.vmem %s3, %s487
        %s489 = sand.u32 %s146, 1
        %s490 = scalar_lea.sflag [#allocation6], %s489
        %s491 = sand.u32 %s146, 1
        %s492 = smul.addr %s491, 2
        %s493 = scalar_lea.vmem [#allocation10], %s492
        // Predicated region
        $region53: #{tpu_custom_call.1} parent=31 // pred_check
          %p494 = pneg %p130
        $region54: #{tpu_custom_call.1} parent=31 // pred_check_branch
          %496 = sbr.rel (%p494) target = $region56
        $region55: #{tpu_custom_call.1} parent=31 // pred_region
          _
        $region56: #{tpu_custom_call.1} parent=31 // pred_fallthru
          _
        // Predicated region
        $region57: #{tpu_custom_call.1} parent=31 // pred_check
          %p497 = pneg %p156
        $region58: #{tpu_custom_call.1} parent=31 // pred_check_branch
          %499 = sbr.rel (%p497) target = $region60
        $region59: #{tpu_custom_call.1} parent=31 // pred_region
          %501 = vsyncadd %s490, 0
          %s502 = smul.addr %s29, 2
          %s503 = scalar_lea.hbm %s4, %s502
          %s505 = sshll.u32 %s493, 4
          %s506 = int_to_ptr.vmem [resolvable:$true] %s505
          %s507 = sshll.u32 %s503, 4
          %s508 = int_to_ptr.hbm [resolvable:$true] %s507
          %510 = dma.vmem_to_hbm [thread:$0]  %s506, 32, %s508, %s490
        $region60: #{tpu_custom_call.1} parent=31 // pred_fallthru
          _
      $region32: #{tpu_custom_call.1} parent=5 // pred_fallthru
        _
      %p511 = scmp.le.s32.totalorder 2, %s20
      // Predicated region
      $region61: #{tpu_custom_call.1} parent=5 // pred_check
        %p512 = pneg %p511
      $region62: #{tpu_custom_call.1} parent=5 // pred_check_branch
        %514 = sbr.rel (%p512) target = $region64
      $region63: #{tpu_custom_call.1} parent=5 // pred_region
        %s515 = ssub.s32 %s20, 2
        // Predicated region
        $region65: #{tpu_custom_call.1} parent=63 // pred_check
          %p516 = pneg %p136
        $region66: #{tpu_custom_call.1} parent=63 // pred_check_branch
          %518 = sbr.rel (%p516) target = $region68
        $region67: #{tpu_custom_call.1} parent=63 // pred_region
          %p519 = scmp.lt.s32.totalorder %s31, 1
          %s520 = scalar_select %p519, %s31, 1
          %s521 = scalar_lea.vmem %s3, %s520
        $region68: #{tpu_custom_call.1} parent=63 // pred_fallthru
          _
        // Predicated region
        $region69: #{tpu_custom_call.1} parent=63 // pred_check
          %p522 = pneg %p162
        $region70: #{tpu_custom_call.1} parent=63 // pred_check_branch
          %524 = sbr.rel (%p522) target = $region72
        $region71: #{tpu_custom_call.1} parent=63 // pred_region
          %s525 = sand.u32 %s147, 1
          %s526 = scalar_lea.sflag [#allocation6], %s525
          %s527 = sand.u32 %s147, 1
          %s528 = smul.addr %s527, 2
          %s529 = scalar_lea.vmem [#allocation10], %s528
          %531 = dma.done %s526, 32
        $region72: #{tpu_custom_call.1} parent=63 // pred_fallthru
          _
      $region64: #{tpu_custom_call.1} parent=5 // pred_fallthru
        _
    $region6: #{tpu_custom_call.1} parent=1 // loop_footer
      %s24 = sadd.s32 1, %s20
    $region7: #{tpu_custom_call.1} parent=1 // loop_footer_branch
      %19 = sbr.rel target = $region3
    $region8: #{tpu_custom_call.1} parent=1 // loop_exit
      _
    %532 = vsyncpa [#allocation5], 1
    %s533 = scalar_lea.sflag [#allocation5], 1
    %534 = vsyncpa %s533, 1
    %535 = vsyncpa [#allocation8], 1
    %s536 = scalar_lea.sflag [#allocation8], 1
    %537 = vsyncpa %s536, 1
    %538 = vsyncpa [#allocation6], 1
    %s539 = scalar_lea.sflag [#allocation6], 1
    %540 = vsyncpa %s539, 1

</llo_original>
